<compile_context>
chip_gen: v7x
topology: tpu7x:2x2x1
jax: 0.10.0
libtpu: 0.0.40
codegen_flags: <defaults>
</compile_context>

<pallas_src>
import functools

import jax
import jax.numpy as jnp
from jax.experimental import pallas as pl
from jax.experimental.pallas import tpu as pltpu

N_LAYERS = 6
F_PAD = 128  # lane-dense padded feature width


def _mlp_kernel(x_ref, w_ref, b_ref, o_ref):
    """Fused 6-layer MLP on one (TB, F_PAD) activation block.

    x_ref: (TB, F_PAD)             zero-padded input activations
    w_ref: (6, F_PAD, F_PAD)       zero-padded weights   (VMEM-resident)
    b_ref: (6, F_PAD)              zero-padded biases    (VMEM-resident)
    o_ref: (TB, F_PAD)             zero-padded output (cols >= n_out are 0)
    """
    h = x_ref[...]
    b_all = b_ref[...]
    for layer in range(N_LAYERS - 1):
        h = jnp.dot(h, w_ref[layer], preferred_element_type=jnp.float32)
        h = jnp.maximum(h + b_all[layer:layer + 1, :], 0.0)
    h = jnp.dot(h, w_ref[N_LAYERS - 1], preferred_element_type=jnp.float32)
    h = h + b_all[N_LAYERS - 1:N_LAYERS, :]
    o_ref[...] = h.astype(o_ref.dtype)


def _round_up(n, m):
    return ((n + m - 1) // m) * m


def pack_params(params):
    """Pack 6 (W [in,out], b [out]) pairs into zero-padded lane-dense buffers."""
    assert len(params) == N_LAYERS
    wp = jnp.zeros((N_LAYERS, F_PAD, F_PAD), jnp.float32)
    bp = jnp.zeros((N_LAYERS, F_PAD), jnp.float32)
    for layer, (w, b) in enumerate(params):
        di, do = w.shape
        wp = wp.at[layer, :di, :do].set(w.astype(jnp.float32))
        bp = bp.at[layer, :do].set(jnp.reshape(b, (-1,)).astype(jnp.float32))
    return wp, bp


@functools.partial(jax.jit, static_argnames=("n_in", "n_out", "tb"))
def net_forward(x, wp, bp, *, n_in, n_out, tb=512):
    """Forward pass: x [B, n_in] -> [B, n_out]."""
    B = x.shape[0]
    tb = max(8, (min(tb, _round_up(B, 8)) // 8) * 8)  # batch tile, multiple of 8
    Bp = _round_up(B, tb)

    # Zero-pad batch to a tile multiple and features to the 128-lane width.
    xp = jnp.zeros((Bp, F_PAD), jnp.float32).at[:B, :n_in].set(
        x.astype(jnp.float32))

    out = pl.pallas_call(
        _mlp_kernel,
        out_shape=jax.ShapeDtypeStruct((Bp, F_PAD), jnp.float32),
        grid=(Bp // tb,),
        in_specs=[
            pl.BlockSpec((tb, F_PAD), lambda i: (i, 0)),                 # x tile
            pl.BlockSpec((N_LAYERS, F_PAD, F_PAD), lambda i: (0, 0, 0)),  # weights (resident)
            pl.BlockSpec((N_LAYERS, F_PAD), lambda i: (0, 0)),            # biases  (resident)
        ],
        out_specs=pl.BlockSpec((tb, F_PAD), lambda i: (i, 0)),
        compiler_params=pltpu.CompilerParams(
            dimension_semantics=("parallel",),
            vmem_limit_bytes=32 * 1024 * 1024,
        ),
    )(xp, wp, bp)
    return out[:B, :n_out]


def init_linear(key, n_in, n_out):
    """Deterministic init matching nn.Linear's default U(-1/sqrt(in), 1/sqrt(in)).

    Returned W is [n_in, n_out] (transposed from PyTorch's [out, in])."""
    kw, kb = jax.random.split(key)
    bound = 1.0 / jnp.sqrt(jnp.float32(n_in))
    w = jax.random.uniform(kw, (n_in, n_out), jnp.float32, -bound, bound)
    b = jax.random.uniform(kb, (n_out,), jnp.float32, -bound, bound)
    return w, b


def reference_forward(x, params):
    """Pure-JAX reference for correctness checking."""
    h = x
    for i, (w, b) in enumerate(params):
        h = h @ w + b[None, :]
        if i < len(params) - 1:
            h = jnp.maximum(h, 0.0)
    return h


# TODO(synk): normaliseSpectral / normaliseInfty / prod_lip / train_ are
# training-time weight-renormalization utilities, not part of forward();
# they are intentionally not implemented as kernels.


if __name__ == "__main__":
    # Shapes consistent with the module: n_in=4, n_h=32, n_out=2.
    n_in, n_h, n_out = 4, 32, 2

    key = jax.random.PRNGKey(0)
    keys = jax.random.split(key, 8)

    dims = [(n_in, n_h)] + [(n_h, n_h)] * 4 + [(n_h, n_out)]
    params = [init_linear(keys[i], di, do) for i, (di, do) in enumerate(dims)]
    wp, bp = pack_params(params)

    # Small batch (single grid step).
    x_small = jax.random.normal(keys[6], (8, n_in), jnp.float32)
    out_small = jax.block_until_ready(
        net_forward(x_small, wp, bp, n_in=n_in, n_out=n_out, tb=256))
    ref_small = reference_forward(x_small, params)
    assert out_small.shape == (8, n_out)
    assert jnp.allclose(out_small, ref_small, atol=1e-5, rtol=1e-5)

    # Larger, tile-unaligned batch to exercise the batch grid + padding path.
    x_big = jax.random.normal(keys[7], (300, n_in), jnp.float32)
    out_big = jax.block_until_ready(
        net_forward(x_big, wp, bp, n_in=n_in, n_out=n_out, tb=128))
    ref_big = reference_forward(x_big, params)
    assert out_big.shape == (300, n_out)
    assert jnp.allclose(out_big, ref_big, atol=1e-5, rtol=1e-5)

    print("KERNEL_OK")
</pallas_src>

<mosaic_0001>
module attributes {stable_mosaic.version = 11 : i64} {
  func.func @_mlp_kernel(%arg0: i32, %arg1: memref<8x128xf32, #tpu.memory_space<vmem>>, %arg2: memref<6x128x128xf32, #tpu.memory_space<vmem>>, %arg3: memref<6x128xf32, #tpu.memory_space<vmem>>, %arg4: memref<8x128xf32, #tpu.memory_space<vmem>>) attributes {dimension_semantics = [#tpu.dimension_semantics<parallel>], iteration_bounds = array<i64: 1>, scalar_prefetch = 0 : i64, scratch_operands = 0 : i64, tpu.core_type = #tpu.core_type<tc>, window_params = [{transform_indices = @transform_0, window_bounds = array<i64: 8, 128>}, {pipeline_mode = #tpu.pipeline_mode<synchronous>, transform_indices = @transform_1, window_bounds = array<i64: 6, 128, 128>}, {pipeline_mode = #tpu.pipeline_mode<synchronous>, transform_indices = @transform_2, window_bounds = array<i64: 6, 128>}, {transform_indices = @transform_3, window_bounds = array<i64: 8, 128>}]} {
    %c0 = arith.constant 0 : index
    %c0_0 = arith.constant 0 : index
    %0 = vector.load %arg1[%c0, %c0_0] : memref<8x128xf32, #tpu.memory_space<vmem>>, vector<8x128xf32>
    %c0_1 = arith.constant 0 : index
    %c0_2 = arith.constant 0 : index
    %1 = vector.load %arg3[%c0_1, %c0_2] : memref<6x128xf32, #tpu.memory_space<vmem>>, vector<6x128xf32>
    %c0_3 = arith.constant 0 : index
    %c0_4 = arith.constant 0 : index
    %c0_5 = arith.constant 0 : index
    %2 = vector.load %arg2[%c0_3, %c0_4, %c0_5] : memref<6x128x128xf32, #tpu.memory_space<vmem>>, vector<1x128x128xf32>
    %3 = vector.shape_cast %2 : vector<1x128x128xf32> to vector<128x128xf32>
    %cst = arith.constant dense<0.000000e+00> : vector<8x128xf32>
    %4 = tpu.matmul %0, %3, %cst {dimension_numbers = #tpu.dot_dimension_numbers<[1], [0], [0], [1], [0, 0, 1, 1], [], []>} : vector<8x128xf32>, vector<128x128xf32>, vector<8x128xf32> -> vector<8x128xf32>
    %5 = vector.extract_strided_slice %1 {offsets = [0, 0], sizes = [1, 128], strides = [1, 1]} : vector<6x128xf32> to vector<1x128xf32>
    %6 = vector.broadcast %5 : vector<1x128xf32> to vector<8x128xf32>
    %7 = arith.addf %4, %6 : vector<8x128xf32>
    %cst_6 = arith.constant 0.000000e+00 : f32
    %8 = vector.broadcast %cst_6 : f32 to vector<8x128xf32>
    %9 = arith.maximumf %7, %8 : vector<8x128xf32>
    %c1 = arith.constant 1 : index
    %c0_7 = arith.constant 0 : index
    %c0_8 = arith.constant 0 : index
    %10 = vector.load %arg2[%c1, %c0_7, %c0_8] : memref<6x128x128xf32, #tpu.memory_space<vmem>>, vector<1x128x128xf32>
    %11 = vector.shape_cast %10 : vector<1x128x128xf32> to vector<128x128xf32>
    %cst_9 = arith.constant dense<0.000000e+00> : vector<8x128xf32>
    %12 = tpu.matmul %9, %11, %cst_9 {dimension_numbers = #tpu.dot_dimension_numbers<[1], [0], [0], [1], [0, 0, 1, 1], [], []>} : vector<8x128xf32>, vector<128x128xf32>, vector<8x128xf32> -> vector<8x128xf32>
    %13 = vector.extract_strided_slice %1 {offsets = [1, 0], sizes = [1, 128], strides = [1, 1]} : vector<6x128xf32> to vector<1x128xf32>
    %14 = vector.broadcast %13 : vector<1x128xf32> to vector<8x128xf32>
    %15 = arith.addf %12, %14 : vector<8x128xf32>
    %cst_10 = arith.constant 0.000000e+00 : f32
    %16 = vector.broadcast %cst_10 : f32 to vector<8x128xf32>
    %17 = arith.maximumf %15, %16 : vector<8x128xf32>
    %c2 = arith.constant 2 : index
    %c0_11 = arith.constant 0 : index
    %c0_12 = arith.constant 0 : index
    %18 = vector.load %arg2[%c2, %c0_11, %c0_12] : memref<6x128x128xf32, #tpu.memory_space<vmem>>, vector<1x128x128xf32>
    %19 = vector.shape_cast %18 : vector<1x128x128xf32> to vector<128x128xf32>
    %cst_13 = arith.constant dense<0.000000e+00> : vector<8x128xf32>
    %20 = tpu.matmul %17, %19, %cst_13 {dimension_numbers = #tpu.dot_dimension_numbers<[1], [0], [0], [1], [0, 0, 1, 1], [], []>} : vector<8x128xf32>, vector<128x128xf32>, vector<8x128xf32> -> vector<8x128xf32>
    %21 = vector.extract_strided_slice %1 {offsets = [2, 0], sizes = [1, 128], strides = [1, 1]} : vector<6x128xf32> to vector<1x128xf32>
    %22 = vector.broadcast %21 : vector<1x128xf32> to vector<8x128xf32>
    %23 = arith.addf %20, %22 : vector<8x128xf32>
    %cst_14 = arith.constant 0.000000e+00 : f32
    %24 = vector.broadcast %cst_14 : f32 to vector<8x128xf32>
    %25 = arith.maximumf %23, %24 : vector<8x128xf32>
    %c3 = arith.constant 3 : index
    %c0_15 = arith.constant 0 : index
    %c0_16 = arith.constant 0 : index
    %26 = vector.load %arg2[%c3, %c0_15, %c0_16] : memref<6x128x128xf32, #tpu.memory_space<vmem>>, vector<1x128x128xf32>
    %27 = vector.shape_cast %26 : vector<1x128x128xf32> to vector<128x128xf32>
    %cst_17 = arith.constant dense<0.000000e+00> : vector<8x128xf32>
    %28 = tpu.matmul %25, %27, %cst_17 {dimension_numbers = #tpu.dot_dimension_numbers<[1], [0], [0], [1], [0, 0, 1, 1], [], []>} : vector<8x128xf32>, vector<128x128xf32>, vector<8x128xf32> -> vector<8x128xf32>
    %29 = vector.extract_strided_slice %1 {offsets = [3, 0], sizes = [1, 128], strides = [1, 1]} : vector<6x128xf32> to vector<1x128xf32>
    %30 = vector.broadcast %29 : vector<1x128xf32> to vector<8x128xf32>
    %31 = arith.addf %28, %30 : vector<8x128xf32>
    %cst_18 = arith.constant 0.000000e+00 : f32
    %32 = vector.broadcast %cst_18 : f32 to vector<8x128xf32>
    %33 = arith.maximumf %31, %32 : vector<8x128xf32>
    %c4 = arith.constant 4 : index
    %c0_19 = arith.constant 0 : index
    %c0_20 = arith.constant 0 : index
    %34 = vector.load %arg2[%c4, %c0_19, %c0_20] : memref<6x128x128xf32, #tpu.memory_space<vmem>>, vector<1x128x128xf32>
    %35 = vector.shape_cast %34 : vector<1x128x128xf32> to vector<128x128xf32>
    %cst_21 = arith.constant dense<0.000000e+00> : vector<8x128xf32>
    %36 = tpu.matmul %33, %35, %cst_21 {dimension_numbers = #tpu.dot_dimension_numbers<[1], [0], [0], [1], [0, 0, 1, 1], [], []>} : vector<8x128xf32>, vector<128x128xf32>, vector<8x128xf32> -> vector<8x128xf32>
    %37 = vector.extract_strided_slice %1 {offsets = [4, 0], sizes = [1, 128], strides = [1, 1]} : vector<6x128xf32> to vector<1x128xf32>
    %38 = vector.broadcast %37 : vector<1x128xf32> to vector<8x128xf32>
    %39 = arith.addf %36, %38 : vector<8x128xf32>
    %cst_22 = arith.constant 0.000000e+00 : f32
    %40 = vector.broadcast %cst_22 : f32 to vector<8x128xf32>
    %41 = arith.maximumf %39, %40 : vector<8x128xf32>
    %c5 = arith.constant 5 : index
    %c0_23 = arith.constant 0 : index
    %c0_24 = arith.constant 0 : index
    %42 = vector.load %arg2[%c5, %c0_23, %c0_24] : memref<6x128x128xf32, #tpu.memory_space<vmem>>, vector<1x128x128xf32>
    %43 = vector.shape_cast %42 : vector<1x128x128xf32> to vector<128x128xf32>
    %cst_25 = arith.constant dense<0.000000e+00> : vector<8x128xf32>
    %44 = tpu.matmul %41, %43, %cst_25 {dimension_numbers = #tpu.dot_dimension_numbers<[1], [0], [0], [1], [0, 0, 1, 1], [], []>} : vector<8x128xf32>, vector<128x128xf32>, vector<8x128xf32> -> vector<8x128xf32>
    %45 = vector.extract_strided_slice %1 {offsets = [5, 0], sizes = [1, 128], strides = [1, 1]} : vector<6x128xf32> to vector<1x128xf32>
    %46 = vector.broadcast %45 : vector<1x128xf32> to vector<8x128xf32>
    %47 = arith.addf %44, %46 : vector<8x128xf32>
    %c0_26 = arith.constant 0 : index
    %c0_27 = arith.constant 0 : index
    %48 = vector.load %arg4[%c0_26, %c0_27] : memref<8x128xf32, #tpu.memory_space<vmem>>, vector<8x128xf32>
    tpu.vector_store %arg4[%c0_26, %c0_27], %47 {strides = array<i32>} : memref<8x128xf32, #tpu.memory_space<vmem>>, vector<8x128xf32>,
    return
  }
  func.func @transform_0(%arg0: i32) -> (i32, i32) {
    %c0_i32 = arith.constant 0 : i32
    %c0_i32_0 = arith.constant 0 : i32
    return %arg0, %c0_i32 : i32, i32
  }
  func.func @transform_1(%arg0: i32) -> (i32, i32, i32) {
    %c0_i32 = arith.constant 0 : i32
    %c0_i32_0 = arith.constant 0 : i32
    %c0_i32_1 = arith.constant 0 : i32
    %c0_i32_2 = arith.constant 0 : i32
    return %c0_i32, %c0_i32_0, %c0_i32_1 : i32, i32, i32
  }
  func.func @transform_2(%arg0: i32) -> (i32, i32) {
    %c0_i32 = arith.constant 0 : i32
    %c0_i32_0 = arith.constant 0 : i32
    %c0_i32_1 = arith.constant 0 : i32
    return %c0_i32, %c0_i32_0 : i32, i32
  }
  func.func @transform_3(%arg0: i32) -> (i32, i32) {
    %c0_i32 = arith.constant 0 : i32
    %c0_i32_0 = arith.constant 0 : i32
    return %arg0, %c0_i32 : i32, i32
  }
}

</mosaic_0001>

<llo_original>
// kernel: net_forward.1
$region0: #{net_forward.1}
  #allocation0 [shape = 'u32[]', space=smem, size = 0x4, offset = 0x4, fixed_abs, tag = 'smem constant byte address 0x4 - core index']
  #allocation1 [shape = 'u32[144,128]{1,0:T(1,128)}', space=vmem, size = 0x12000, scoped, tag = 'internal scratch']
  %s0 = inlined_call_operand.vmem [shape: f32[8,128], index: 0, kind: input, shape index: {}]
  %s1 = inlined_call_operand.hbm [shape: f32[6,128,128], index: 1, kind: input, shape index: {}]
  %s2 = inlined_call_operand.vmem [shape: f32[6,128], index: 2, kind: input, shape index: {}]
  %s3 = inlined_call_operand.vmem [shape: f32[8,128], index: 3, kind: output, shape index: {}]
  %s4 = sld [smem:[#allocation0]]
  $region26: #{net_forward.1} parent=0
    _
  %s6 = ssub.s32 1, %s4
  %s7 = scalar_select 0, %s6, %s4
  $region1: #{net_forward.1} parent=0
    #allocation2 [shape = 'u8[393216]{0}', space=vmem, size = 0x60000, scoped, tag = 'input window, operand 1, single buffered']
    #allocation3 [shape = 's32[1]{0}', space=sflag, size = 0x4, scoped, tag = 'scoped memory for net_forward.1']
    %8 = vsyncpa [#allocation3], 0
    // Predicated region
    $region2: #{net_forward.1} parent=1 // pred_check
      _
    $region3: #{net_forward.1} parent=1 // pred_check_branch
      %10 = sbr.rel (0) target = $region5
    $region4: #{net_forward.1} parent=1 // pred_region
      _
    $region5: #{net_forward.1} parent=1 // pred_fallthru
      _
    // Predicated region
    $region6: #{net_forward.1} parent=1 // pred_check
      _
    $region7: #{net_forward.1} parent=1 // pred_check_branch
      %12 = sbr.rel (0) target = $region9
    $region8: #{net_forward.1} parent=1 // pred_region
      %s14 = ssub.s32 12288, 12288
      %15 = vsyncadd [#allocation3], %s14
      %s16 = sshll.u32 [#allocation2], 4
      %s17 = int_to_ptr.vmem [resolvable:$true] %s16
      %22 = dma.hbm_to_vmem [thread:$0]  %s1, 12288, %s17, [#allocation3], 128, 128, 8
    $region9: #{net_forward.1} parent=1 // pred_fallthru
      _
    // Predicated region
    $region10: #{net_forward.1} parent=1 // pred_check
      _
    $region11: #{net_forward.1} parent=1 // pred_check_branch
      %24 = sbr.rel (0) target = $region13
    $region12: #{net_forward.1} parent=1 // pred_region
      _
    $region13: #{net_forward.1} parent=1 // pred_fallthru
      _
    // Predicated region
    $region14: #{net_forward.1} parent=1 // pred_check
      _
    $region15: #{net_forward.1} parent=1 // pred_check_branch
      %26 = sbr.rel (0) target = $region17
    $region16: #{net_forward.1} parent=1 // pred_region
      %27 = dma.done [#allocation3], 12288
    $region17: #{net_forward.1} parent=1 // pred_fallthru
      _
    %v28 = vld [vmem:[%s0] sm:$0xff]
    %v29 = vld [vmem:[%s2] sm:$0x3f]
    %v30 = vld [vmem:[#allocation2] sm:$0xff]
    %v31 = vld [vmem:[#allocation2 + $0x8] sm:$0xff]
    %v32 = vld [vmem:[#allocation2 + $0x10] sm:$0xff]
    %v33 = vld [vmem:[#allocation2 + $0x18] sm:$0xff]
    %v34 = vld [vmem:[#allocation2 + $0x20] sm:$0xff]
    %v35 = vld [vmem:[#allocation2 + $0x28] sm:$0xff]
    %v36 = vld [vmem:[#allocation2 + $0x30] sm:$0xff]
    %v37 = vld [vmem:[#allocation2 + $0x38] sm:$0xff]
    %v38 = vld [vmem:[#allocation2 + $0x40] sm:$0xff]
    %v39 = vld [vmem:[#allocation2 + $0x48] sm:$0xff]
    %v40 = vld [vmem:[#allocation2 + $0x50] sm:$0xff]
    %v41 = vld [vmem:[#allocation2 + $0x58] sm:$0xff]
    %v42 = vld [vmem:[#allocation2 + $0x60] sm:$0xff]
    %v43 = vld [vmem:[#allocation2 + $0x68] sm:$0xff]
    %v44 = vld [vmem:[#allocation2 + $0x70] sm:$0xff]
    %v45 = vld [vmem:[#allocation2 + $0x78] sm:$0xff]
    %v46 = vlaneseq
    %v47 = vshrl.u32 %v46, 7
    %v48 = vsub.s32 0, %v47
    %v49 = vrot.slane %v29, %v48
    %50 = vmatprep.subr.mxu0 0.0
    %51 = vmatpush1.msra.mxu0 %v30
    %52 = vmatprep.subr.mxu0 0.0
    %53 = vmatpush1.msra.mxu0 %v31
    %54 = vmatprep.subr.mxu0 0.0
    %55 = vmatpush1.msra.mxu0 %v32
    %56 = vmatprep.subr.mxu0 0.0
    %57 = vmatpush1.msra.mxu0 %v33
    %58 = vmatprep.subr.mxu0 0.0
    %59 = vmatpush1.msra.mxu0 %v34
    %60 = vmatprep.subr.mxu0 0.0
    %61 = vmatpush1.msra.mxu0 %v35
    %62 = vmatprep.subr.mxu0 0.0
    %63 = vmatpush1.msra.mxu0 %v36
    %64 = vmatprep.subr.mxu0 0.0
    %65 = vmatpush1.msra.mxu0 %v37
    %66 = vmatprep.subr.mxu0 0.0
    %67 = vmatpush1.msra.mxu0 %v38
    %68 = vmatprep.subr.mxu0 0.0
    %69 = vmatpush1.msra.mxu0 %v39
    %70 = vmatprep.subr.mxu0 0.0
    %71 = vmatpush1.msra.mxu0 %v40
    %72 = vmatprep.subr.mxu0 0.0
    %73 = vmatpush1.msra.mxu0 %v41
    %74 = vmatprep.subr.mxu0 0.0
    %75 = vmatpush1.msra.mxu0 %v42
    %76 = vmatprep.subr.mxu0 0.0
    %77 = vmatpush1.msra.mxu0 %v43
    %78 = vmatprep.subr.mxu0 0.0
    %79 = vmatpush1.msra.mxu0 %v44
    %80 = vmatprep.subr.mxu0 0.0
    %81 = vmatpush1.msra.mxu0 %v45
    %82 = vmatprep.subr.mxu0 0.0
    %83 = vmatpush1.msra.mxu0 0.0
    %84 = vmatprep.subr.mxu0 0.0
    %85 = vmatpush1.msra.mxu0 0.0
    %86 = vmatprep.subr.mxu0 0.0
    %87 = vmatpush1.msra.mxu0 0.0
    %88 = vmatprep.subr.mxu0 0.0
    %89 = vmatpush1.msra.mxu0 0.0
    %90 = vmatprep.subr.mxu0 0.0
    %91 = vmatpush1.msra.mxu0 0.0
    %92 = vmatprep.subr.mxu0 0.0
    %93 = vmatpush1.msra.mxu0 0.0
    %94 = vmatprep.subr.mxu0 0.0
    %95 = vmatpush1.msra.mxu0 0.0
    %96 = vmatprep.subr.mxu0 0.0
    %97 = vmatpush1.msra.mxu0 0.0
    %98 = vmatprep.subr.mxu0 0.0
    %99 = vmatpush1.msra.mxu0 0.0
    %100 = vmatprep.subr.mxu0 0.0
    %101 = vmatpush1.msra.mxu0 0.0
    %102 = vmatprep.subr.mxu0 0.0
    %103 = vmatpush1.msra.mxu0 0.0
    %104 = vmatprep.subr.mxu0 0.0
    %105 = vmatpush1.msra.mxu0 0.0
    %106 = vmatprep.subr.mxu0 0.0
    %107 = vmatpush1.msra.mxu0 0.0
    %108 = vmatprep.subr.mxu0 0.0
    %109 = vmatpush1.msra.mxu0 0.0
    %110 = vmatprep.subr.mxu0 0.0
    %111 = vmatpush1.msra.mxu0 0.0
    %112 = vmatprep.subr.mxu0 0.0
    %113 = vmatpush1.msra.mxu0 0.0
    %114 = vmatprep.mubr.f32.mxu0 0.0
    %115 = vmatmul.mubr.f32.gmra.mrb[0].mxu0 %v28
    %v116 = vpop.f32.mrb[0].mxu0
    %v117 = vadd.f32 %v49, %v116
    %v118 = vpop.f32.mrb[0].mxu0
    %119 = vdwg.mxu0
    %v120 = vmax.f32 %v117, 0.0
    %s121 = scalar_lea.vmem [#allocation2], 128
    %v122 = vld [vmem:[%s121] sm:$0xff]
    %v123 = vld [vmem:[%s121 + $0x8] sm:$0xff]
    %v124 = vld [vmem:[%s121 + $0x10] sm:$0xff]
    %v125 = vld [vmem:[%s121 + $0x18] sm:$0xff]
    %v126 = vld [vmem:[%s121 + $0x20] sm:$0xff]
    %v127 = vld [vmem:[%s121 + $0x28] sm:$0xff]
    %v128 = vld [vmem:[%s121 + $0x30] sm:$0xff]
    %v129 = vld [vmem:[%s121 + $0x38] sm:$0xff]
    %v130 = vld [vmem:[%s121 + $0x40] sm:$0xff]
    %v131 = vld [vmem:[%s121 + $0x48] sm:$0xff]
    %v132 = vld [vmem:[%s121 + $0x50] sm:$0xff]
    %v133 = vld [vmem:[%s121 + $0x58] sm:$0xff]
    %v134 = vld [vmem:[%s121 + $0x60] sm:$0xff]
    %v135 = vld [vmem:[%s121 + $0x68] sm:$0xff]
    %v136 = vld [vmem:[%s121 + $0x70] sm:$0xff]
    %v137 = vld [vmem:[%s121 + $0x78] sm:$0xff]
    %v138 = vlaneseq
    %v139 = vshrl.u32 %v138, 7
    %v140 = vsub.s32 1, %v139
    %v141 = vrot.slane %v29, %v140
    %142 = vmatprep.subr.mxu0 0.0
    %143 = vmatpush1.msra.mxu0 %v122
    %144 = vmatprep.subr.mxu0 0.0
    %145 = vmatpush1.msra.mxu0 %v123
    %146 = vmatprep.subr.mxu0 0.0
    %147 = vmatpush1.msra.mxu0 %v124
    %148 = vmatprep.subr.mxu0 0.0
    %149 = vmatpush1.msra.mxu0 %v125
    %150 = vmatprep.subr.mxu0 0.0
    %151 = vmatpush1.msra.mxu0 %v126
    %152 = vmatprep.subr.mxu0 0.0
    %153 = vmatpush1.msra.mxu0 %v127
    %154 = vmatprep.subr.mxu0 0.0
    %155 = vmatpush1.msra.mxu0 %v128
    %156 = vmatprep.subr.mxu0 0.0
    %157 = vmatpush1.msra.mxu0 %v129
    %158 = vmatprep.subr.mxu0 0.0
    %159 = vmatpush1.msra.mxu0 %v130
    %160 = vmatprep.subr.mxu0 0.0
    %161 = vmatpush1.msra.mxu0 %v131
    %162 = vmatprep.subr.mxu0 0.0
    %163 = vmatpush1.msra.mxu0 %v132
    %164 = vmatprep.subr.mxu0 0.0
    %165 = vmatpush1.msra.mxu0 %v133
    %166 = vmatprep.subr.mxu0 0.0
    %167 = vmatpush1.msra.mxu0 %v134
    %168 = vmatprep.subr.mxu0 0.0
    %169 = vmatpush1.msra.mxu0 %v135
    %170 = vmatprep.subr.mxu0 0.0
    %171 = vmatpush1.msra.mxu0 %v136
    %172 = vmatprep.subr.mxu0 0.0
    %173 = vmatpush1.msra.mxu0 %v137
    %174 = vmatprep.subr.mxu0 0.0
    %175 = vmatpush1.msra.mxu0 0.0
    %176 = vmatprep.subr.mxu0 0.0
    %177 = vmatpush1.msra.mxu0 0.0
    %178 = vmatprep.subr.mxu0 0.0
    %179 = vmatpush1.msra.mxu0 0.0
    %180 = vmatprep.subr.mxu0 0.0
    %181 = vmatpush1.msra.mxu0 0.0
    %182 = vmatprep.subr.mxu0 0.0
    %183 = vmatpush1.msra.mxu0 0.0
    %184 = vmatprep.subr.mxu0 0.0
    %185 = vmatpush1.msra.mxu0 0.0
    %186 = vmatprep.subr.mxu0 0.0
    %187 = vmatpush1.msra.mxu0 0.0
    %188 = vmatprep.subr.mxu0 0.0
    %189 = vmatpush1.msra.mxu0 0.0
    %190 = vmatprep.subr.mxu0 0.0
    %191 = vmatpush1.msra.mxu0 0.0
    %192 = vmatprep.subr.mxu0 0.0
    %193 = vmatpush1.msra.mxu0 0.0
    %194 = vmatprep.subr.mxu0 0.0
    %195 = vmatpush1.msra.mxu0 0.0
    %196 = vmatprep.subr.mxu0 0.0
    %197 = vmatpush1.msra.mxu0 0.0
    %198 = vmatprep.subr.mxu0 0.0
    %199 = vmatpush1.msra.mxu0 0.0
    %200 = vmatprep.subr.mxu0 0.0
    %201 = vmatpush1.msra.mxu0 0.0
    %202 = vmatprep.subr.mxu0 0.0
    %203 = vmatpush1.msra.mxu0 0.0
    %204 = vmatprep.subr.mxu0 0.0
    %205 = vmatpush1.msra.mxu0 0.0
    %206 = vmatprep.mubr.f32.mxu0 0.0
    %207 = vmatmul.mubr.f32.gmra.mrb[0].mxu0 %v120
    %v208 = vpop.f32.mrb[0].mxu0
    %v209 = vadd.f32 %v141, %v208
    %v210 = vpop.f32.mrb[0].mxu0
    %211 = vdwg.mxu0
    %v212 = vmax.f32 %v209, 0.0
    %s213 = scalar_lea.vmem [#allocation2], 256
    %v214 = vld [vmem:[%s213] sm:$0xff]
    %v215 = vld [vmem:[%s213 + $0x8] sm:$0xff]
    %v216 = vld [vmem:[%s213 + $0x10] sm:$0xff]
    %v217 = vld [vmem:[%s213 + $0x18] sm:$0xff]
    %v218 = vld [vmem:[%s213 + $0x20] sm:$0xff]
    %v219 = vld [vmem:[%s213 + $0x28] sm:$0xff]
    %v220 = vld [vmem:[%s213 + $0x30] sm:$0xff]
    %v221 = vld [vmem:[%s213 + $0x38] sm:$0xff]
    %v222 = vld [vmem:[%s213 + $0x40] sm:$0xff]
    %v223 = vld [vmem:[%s213 + $0x48] sm:$0xff]
    %v224 = vld [vmem:[%s213 + $0x50] sm:$0xff]
    %v225 = vld [vmem:[%s213 + $0x58] sm:$0xff]
    %v226 = vld [vmem:[%s213 + $0x60] sm:$0xff]
    %v227 = vld [vmem:[%s213 + $0x68] sm:$0xff]
    %v228 = vld [vmem:[%s213 + $0x70] sm:$0xff]
    %v229 = vld [vmem:[%s213 + $0x78] sm:$0xff]
    %v230 = vlaneseq
    %v231 = vshrl.u32 %v230, 7
    %v232 = vsub.s32 2, %v231
    %v233 = vrot.slane %v29, %v232
    %234 = vmatprep.subr.mxu0 0.0
    %235 = vmatpush1.msra.mxu0 %v214
    %236 = vmatprep.subr.mxu0 0.0
    %237 = vmatpush1.msra.mxu0 %v215
    %238 = vmatprep.subr.mxu0 0.0
    %239 = vmatpush1.msra.mxu0 %v216
    %240 = vmatprep.subr.mxu0 0.0
    %241 = vmatpush1.msra.mxu0 %v217
    %242 = vmatprep.subr.mxu0 0.0
    %243 = vmatpush1.msra.mxu0 %v218
    %244 = vmatprep.subr.mxu0 0.0
    %245 = vmatpush1.msra.mxu0 %v219
    %246 = vmatprep.subr.mxu0 0.0
    %247 = vmatpush1.msra.mxu0 %v220
    %248 = vmatprep.subr.mxu0 0.0
    %249 = vmatpush1.msra.mxu0 %v221
    %250 = vmatprep.subr.mxu0 0.0
    %251 = vmatpush1.msra.mxu0 %v222
    %252 = vmatprep.subr.mxu0 0.0
    %253 = vmatpush1.msra.mxu0 %v223
    %254 = vmatprep.subr.mxu0 0.0
    %255 = vmatpush1.msra.mxu0 %v224
    %256 = vmatprep.subr.mxu0 0.0
    %257 = vmatpush1.msra.mxu0 %v225
    %258 = vmatprep.subr.mxu0 0.0
    %259 = vmatpush1.msra.mxu0 %v226
    %260 = vmatprep.subr.mxu0 0.0
    %261 = vmatpush1.msra.mxu0 %v227
    %262 = vmatprep.subr.mxu0 0.0
    %263 = vmatpush1.msra.mxu0 %v228
    %264 = vmatprep.subr.mxu0 0.0
    %265 = vmatpush1.msra.mxu0 %v229
    %266 = vmatprep.subr.mxu0 0.0
    %267 = vmatpush1.msra.mxu0 0.0
    %268 = vmatprep.subr.mxu0 0.0
    %269 = vmatpush1.msra.mxu0 0.0
    %270 = vmatprep.subr.mxu0 0.0
    %271 = vmatpush1.msra.mxu0 0.0
    %272 = vmatprep.subr.mxu0 0.0
    %273 = vmatpush1.msra.mxu0 0.0
    %274 = vmatprep.subr.mxu0 0.0
    %275 = vmatpush1.msra.mxu0 0.0
    %276 = vmatprep.subr.mxu0 0.0
    %277 = vmatpush1.msra.mxu0 0.0
    %278 = vmatprep.subr.mxu0 0.0
    %279 = vmatpush1.msra.mxu0 0.0
    %280 = vmatprep.subr.mxu0 0.0
    %281 = vmatpush1.msra.mxu0 0.0
    %282 = vmatprep.subr.mxu0 0.0
    %283 = vmatpush1.msra.mxu0 0.0
    %284 = vmatprep.subr.mxu0 0.0
    %285 = vmatpush1.msra.mxu0 0.0
    %286 = vmatprep.subr.mxu0 0.0
    %287 = vmatpush1.msra.mxu0 0.0
    %288 = vmatprep.subr.mxu0 0.0
    %289 = vmatpush1.msra.mxu0 0.0
    %290 = vmatprep.subr.mxu0 0.0
    %291 = vmatpush1.msra.mxu0 0.0
    %292 = vmatprep.subr.mxu0 0.0
    %293 = vmatpush1.msra.mxu0 0.0
    %294 = vmatprep.subr.mxu0 0.0
    %295 = vmatpush1.msra.mxu0 0.0
    %296 = vmatprep.subr.mxu0 0.0
    %297 = vmatpush1.msra.mxu0 0.0
    %298 = vmatprep.mubr.f32.mxu0 0.0
    %299 = vmatmul.mubr.f32.gmra.mrb[0].mxu0 %v212
    %v300 = vpop.f32.mrb[0].mxu0
    %v301 = vadd.f32 %v233, %v300
    %v302 = vpop.f32.mrb[0].mxu0
    %303 = vdwg.mxu0
    %v304 = vmax.f32 %v301, 0.0
    %s305 = scalar_lea.vmem [#allocation2], 384
    %v306 = vld [vmem:[%s305] sm:$0xff]
    %v307 = vld [vmem:[%s305 + $0x8] sm:$0xff]
    %v308 = vld [vmem:[%s305 + $0x10] sm:$0xff]
    %v309 = vld [vmem:[%s305 + $0x18] sm:$0xff]
    %v310 = vld [vmem:[%s305 + $0x20] sm:$0xff]
    %v311 = vld [vmem:[%s305 + $0x28] sm:$0xff]
    %v312 = vld [vmem:[%s305 + $0x30] sm:$0xff]
    %v313 = vld [vmem:[%s305 + $0x38] sm:$0xff]
    %v314 = vld [vmem:[%s305 + $0x40] sm:$0xff]
    %v315 = vld [vmem:[%s305 + $0x48] sm:$0xff]
    %v316 = vld [vmem:[%s305 + $0x50] sm:$0xff]
    %v317 = vld [vmem:[%s305 + $0x58] sm:$0xff]
    %v318 = vld [vmem:[%s305 + $0x60] sm:$0xff]
    %v319 = vld [vmem:[%s305 + $0x68] sm:$0xff]
    %v320 = vld [vmem:[%s305 + $0x70] sm:$0xff]
    %v321 = vld [vmem:[%s305 + $0x78] sm:$0xff]
    %v322 = vlaneseq
    %v323 = vshrl.u32 %v322, 7
    %v324 = vsub.s32 3, %v323
    %v325 = vrot.slane %v29, %v324
    %326 = vmatprep.subr.mxu0 0.0
    %327 = vmatpush1.msra.mxu0 %v306
    %328 = vmatprep.subr.mxu0 0.0
    %329 = vmatpush1.msra.mxu0 %v307
    %330 = vmatprep.subr.mxu0 0.0
    %331 = vmatpush1.msra.mxu0 %v308
    %332 = vmatprep.subr.mxu0 0.0
    %333 = vmatpush1.msra.mxu0 %v309
    %334 = vmatprep.subr.mxu0 0.0
    %335 = vmatpush1.msra.mxu0 %v310
    %336 = vmatprep.subr.mxu0 0.0
    %337 = vmatpush1.msra.mxu0 %v311
    %338 = vmatprep.subr.mxu0 0.0
    %339 = vmatpush1.msra.mxu0 %v312
    %340 = vmatprep.subr.mxu0 0.0
    %341 = vmatpush1.msra.mxu0 %v313
    %342 = vmatprep.subr.mxu0 0.0
    %343 = vmatpush1.msra.mxu0 %v314
    %344 = vmatprep.subr.mxu0 0.0
    %345 = vmatpush1.msra.mxu0 %v315
    %346 = vmatprep.subr.mxu0 0.0
    %347 = vmatpush1.msra.mxu0 %v316
    %348 = vmatprep.subr.mxu0 0.0
    %349 = vmatpush1.msra.mxu0 %v317
    %350 = vmatprep.subr.mxu0 0.0
    %351 = vmatpush1.msra.mxu0 %v318
    %352 = vmatprep.subr.mxu0 0.0
    %353 = vmatpush1.msra.mxu0 %v319
    %354 = vmatprep.subr.mxu0 0.0
    %355 = vmatpush1.msra.mxu0 %v320
    %356 = vmatprep.subr.mxu0 0.0
    %357 = vmatpush1.msra.mxu0 %v321
    %358 = vmatprep.subr.mxu0 0.0
    %359 = vmatpush1.msra.mxu0 0.0
    %360 = vmatprep.subr.mxu0 0.0
    %361 = vmatpush1.msra.mxu0 0.0
    %362 = vmatprep.subr.mxu0 0.0
    %363 = vmatpush1.msra.mxu0 0.0
    %364 = vmatprep.subr.mxu0 0.0
    %365 = vmatpush1.msra.mxu0 0.0
    %366 = vmatprep.subr.mxu0 0.0
    %367 = vmatpush1.msra.mxu0 0.0
    %368 = vmatprep.subr.mxu0 0.0
    %369 = vmatpush1.msra.mxu0 0.0
    %370 = vmatprep.subr.mxu0 0.0
    %371 = vmatpush1.msra.mxu0 0.0
    %372 = vmatprep.subr.mxu0 0.0
    %373 = vmatpush1.msra.mxu0 0.0
    %374 = vmatprep.subr.mxu0 0.0
    %375 = vmatpush1.msra.mxu0 0.0
    %376 = vmatprep.subr.mxu0 0.0
    %377 = vmatpush1.msra.mxu0 0.0
    %378 = vmatprep.subr.mxu0 0.0
    %379 = vmatpush1.msra.mxu0 0.0
    %380 = vmatprep.subr.mxu0 0.0
    %381 = vmatpush1.msra.mxu0 0.0
    %382 = vmatprep.subr.mxu0 0.0
    %383 = vmatpush1.msra.mxu0 0.0
    %384 = vmatprep.subr.mxu0 0.0
    %385 = vmatpush1.msra.mxu0 0.0
    %386 = vmatprep.subr.mxu0 0.0
    %387 = vmatpush1.msra.mxu0 0.0
    %388 = vmatprep.subr.mxu0 0.0
    %389 = vmatpush1.msra.mxu0 0.0
    %390 = vmatprep.mubr.f32.mxu0 0.0
    %391 = vmatmul.mubr.f32.gmra.mrb[0].mxu0 %v304
    %v392 = vpop.f32.mrb[0].mxu0
    %v393 = vadd.f32 %v325, %v392
    %v394 = vpop.f32.mrb[0].mxu0
    %395 = vdwg.mxu0
    %v396 = vmax.f32 %v393, 0.0
    %s397 = scalar_lea.vmem [#allocation2], 512
    %v398 = vld [vmem:[%s397] sm:$0xff]
    %v399 = vld [vmem:[%s397 + $0x8] sm:$0xff]
    %v400 = vld [vmem:[%s397 + $0x10] sm:$0xff]
    %v401 = vld [vmem:[%s397 + $0x18] sm:$0xff]
    %v402 = vld [vmem:[%s397 + $0x20] sm:$0xff]
    %v403 = vld [vmem:[%s397 + $0x28] sm:$0xff]
    %v404 = vld [vmem:[%s397 + $0x30] sm:$0xff]
    %v405 = vld [vmem:[%s397 + $0x38] sm:$0xff]
    %v406 = vld [vmem:[%s397 + $0x40] sm:$0xff]
    %v407 = vld [vmem:[%s397 + $0x48] sm:$0xff]
    %v408 = vld [vmem:[%s397 + $0x50] sm:$0xff]
    %v409 = vld [vmem:[%s397 + $0x58] sm:$0xff]
    %v410 = vld [vmem:[%s397 + $0x60] sm:$0xff]
    %v411 = vld [vmem:[%s397 + $0x68] sm:$0xff]
    %v412 = vld [vmem:[%s397 + $0x70] sm:$0xff]
    %v413 = vld [vmem:[%s397 + $0x78] sm:$0xff]
    %v414 = vlaneseq
    %v415 = vshrl.u32 %v414, 7
    %v416 = vsub.s32 4, %v415
    %v417 = vrot.slane %v29, %v416
    %418 = vmatprep.subr.mxu0 0.0
    %419 = vmatpush1.msra.mxu0 %v398
    %420 = vmatprep.subr.mxu0 0.0
    %421 = vmatpush1.msra.mxu0 %v399
    %422 = vmatprep.subr.mxu0 0.0
    %423 = vmatpush1.msra.mxu0 %v400
    %424 = vmatprep.subr.mxu0 0.0
    %425 = vmatpush1.msra.mxu0 %v401
    %426 = vmatprep.subr.mxu0 0.0
    %427 = vmatpush1.msra.mxu0 %v402
    %428 = vmatprep.subr.mxu0 0.0
    %429 = vmatpush1.msra.mxu0 %v403
    %430 = vmatprep.subr.mxu0 0.0
    %431 = vmatpush1.msra.mxu0 %v404
    %432 = vmatprep.subr.mxu0 0.0
    %433 = vmatpush1.msra.mxu0 %v405
    %434 = vmatprep.subr.mxu0 0.0
    %435 = vmatpush1.msra.mxu0 %v406
    %436 = vmatprep.subr.mxu0 0.0
    %437 = vmatpush1.msra.mxu0 %v407
    %438 = vmatprep.subr.mxu0 0.0
    %439 = vmatpush1.msra.mxu0 %v408
    %440 = vmatprep.subr.mxu0 0.0
    %441 = vmatpush1.msra.mxu0 %v409
    %442 = vmatprep.subr.mxu0 0.0
    %443 = vmatpush1.msra.mxu0 %v410
    %444 = vmatprep.subr.mxu0 0.0
    %445 = vmatpush1.msra.mxu0 %v411
    %446 = vmatprep.subr.mxu0 0.0
    %447 = vmatpush1.msra.mxu0 %v412
    %448 = vmatprep.subr.mxu0 0.0
    %449 = vmatpush1.msra.mxu0 %v413
    %450 = vmatprep.subr.mxu0 0.0
    %451 = vmatpush1.msra.mxu0 0.0
    %452 = vmatprep.subr.mxu0 0.0
    %453 = vmatpush1.msra.mxu0 0.0
    %454 = vmatprep.subr.mxu0 0.0
    %455 = vmatpush1.msra.mxu0 0.0
    %456 = vmatprep.subr.mxu0 0.0
    %457 = vmatpush1.msra.mxu0 0.0
    %458 = vmatprep.subr.mxu0 0.0
    %459 = vmatpush1.msra.mxu0 0.0
    %460 = vmatprep.subr.mxu0 0.0
    %461 = vmatpush1.msra.mxu0 0.0
    %462 = vmatprep.subr.mxu0 0.0
    %463 = vmatpush1.msra.mxu0 0.0
    %464 = vmatprep.subr.mxu0 0.0
    %465 = vmatpush1.msra.mxu0 0.0
    %466 = vmatprep.subr.mxu0 0.0
    %467 = vmatpush1.msra.mxu0 0.0
    %468 = vmatprep.subr.mxu0 0.0
    %469 = vmatpush1.msra.mxu0 0.0
    %470 = vmatprep.subr.mxu0 0.0
    %471 = vmatpush1.msra.mxu0 0.0
    %472 = vmatprep.subr.mxu0 0.0
    %473 = vmatpush1.msra.mxu0 0.0
    %474 = vmatprep.subr.mxu0 0.0
    %475 = vmatpush1.msra.mxu0 0.0
    %476 = vmatprep.subr.mxu0 0.0
    %477 = vmatpush1.msra.mxu0 0.0
    %478 = vmatprep.subr.mxu0 0.0
    %479 = vmatpush1.msra.mxu0 0.0
    %480 = vmatprep.subr.mxu0 0.0
    %481 = vmatpush1.msra.mxu0 0.0
    %482 = vmatprep.mubr.f32.mxu0 0.0
    %483 = vmatmul.mubr.f32.gmra.mrb[0].mxu0 %v396
    %v484 = vpop.f32.mrb[0].mxu0
    %v485 = vadd.f32 %v417, %v484
    %v486 = vpop.f32.mrb[0].mxu0
    %487 = vdwg.mxu0
    %v488 = vmax.f32 %v485, 0.0
    %s489 = scalar_lea.vmem [#allocation2], 640
    %v490 = vld [vmem:[%s489] sm:$0xff]
    %v491 = vld [vmem:[%s489 + $0x8] sm:$0xff]
    %v492 = vld [vmem:[%s489 + $0x10] sm:$0xff]
    %v493 = vld [vmem:[%s489 + $0x18] sm:$0xff]
    %v494 = vld [vmem:[%s489 + $0x20] sm:$0xff]
    %v495 = vld [vmem:[%s489 + $0x28] sm:$0xff]
    %v496 = vld [vmem:[%s489 + $0x30] sm:$0xff]
    %v497 = vld [vmem:[%s489 + $0x38] sm:$0xff]
    %v498 = vld [vmem:[%s489 + $0x40] sm:$0xff]
    %v499 = vld [vmem:[%s489 + $0x48] sm:$0xff]
    %v500 = vld [vmem:[%s489 + $0x50] sm:$0xff]
    %v501 = vld [vmem:[%s489 + $0x58] sm:$0xff]
    %v502 = vld [vmem:[%s489 + $0x60] sm:$0xff]
    %v503 = vld [vmem:[%s489 + $0x68] sm:$0xff]
    %v504 = vld [vmem:[%s489 + $0x70] sm:$0xff]
    %v505 = vld [vmem:[%s489 + $0x78] sm:$0xff]
    %v506 = vlaneseq
    %v507 = vshrl.u32 %v506, 7
    %v508 = vsub.s32 5, %v507
    %v509 = vrot.slane %v29, %v508
    %510 = vmatprep.subr.mxu0 0.0
    %511 = vmatpush1.msra.mxu0 %v490
    %512 = vmatprep.subr.mxu0 0.0
    %513 = vmatpush1.msra.mxu0 %v491
    %514 = vmatprep.subr.mxu0 0.0
    %515 = vmatpush1.msra.mxu0 %v492
    %516 = vmatprep.subr.mxu0 0.0
    %517 = vmatpush1.msra.mxu0 %v493
    %518 = vmatprep.subr.mxu0 0.0
    %519 = vmatpush1.msra.mxu0 %v494
    %520 = vmatprep.subr.mxu0 0.0
    %521 = vmatpush1.msra.mxu0 %v495
    %522 = vmatprep.subr.mxu0 0.0
    %523 = vmatpush1.msra.mxu0 %v496
    %524 = vmatprep.subr.mxu0 0.0
    %525 = vmatpush1.msra.mxu0 %v497
    %526 = vmatprep.subr.mxu0 0.0
    %527 = vmatpush1.msra.mxu0 %v498
    %528 = vmatprep.subr.mxu0 0.0
    %529 = vmatpush1.msra.mxu0 %v499
    %530 = vmatprep.subr.mxu0 0.0
    %531 = vmatpush1.msra.mxu0 %v500
    %532 = vmatprep.subr.mxu0 0.0
    %533 = vmatpush1.msra.mxu0 %v501
    %534 = vmatprep.subr.mxu0 0.0
    %535 = vmatpush1.msra.mxu0 %v502
    %536 = vmatprep.subr.mxu0 0.0
    %537 = vmatpush1.msra.mxu0 %v503
    %538 = vmatprep.subr.mxu0 0.0
    %539 = vmatpush1.msra.mxu0 %v504
    %540 = vmatprep.subr.mxu0 0.0
    %541 = vmatpush1.msra.mxu0 %v505
    %542 = vmatprep.subr.mxu0 0.0
    %543 = vmatpush1.msra.mxu0 0.0
    %544 = vmatprep.subr.mxu0 0.0
    %545 = vmatpush1.msra.mxu0 0.0
    %546 = vmatprep.subr.mxu0 0.0
    %547 = vmatpush1.msra.mxu0 0.0
    %548 = vmatprep.subr.mxu0 0.0
    %549 = vmatpush1.msra.mxu0 0.0
    %550 = vmatprep.subr.mxu0 0.0
    %551 = vmatpush1.msra.mxu0 0.0
    %552 = vmatprep.subr.mxu0 0.0
    %553 = vmatpush1.msra.mxu0 0.0
    %554 = vmatprep.subr.mxu0 0.0
    %555 = vmatpush1.msra.mxu0 0.0
    %556 = vmatprep.subr.mxu0 0.0
    %557 = vmatpush1.msra.mxu0 0.0
    %558 = vmatprep.subr.mxu0 0.0
    %559 = vmatpush1.msra.mxu0 0.0
    %560 = vmatprep.subr.mxu0 0.0
    %561 = vmatpush1.msra.mxu0 0.0
    %562 = vmatprep.subr.mxu0 0.0
    %563 = vmatpush1.msra.mxu0 0.0
    %564 = vmatprep.subr.mxu0 0.0
    %565 = vmatpush1.msra.mxu0 0.0
    %566 = vmatprep.subr.mxu0 0.0
    %567 = vmatpush1.msra.mxu0 0.0
    %568 = vmatprep.subr.mxu0 0.0
    %569 = vmatpush1.msra.mxu0 0.0
    %570 = vmatprep.subr.mxu0 0.0
    %571 = vmatpush1.msra.mxu0 0.0
    %572 = vmatprep.subr.mxu0 0.0
    %573 = vmatpush1.msra.mxu0 0.0
    %574 = vmatprep.mubr.f32.mxu0 0.0
    %575 = vmatmul.mubr.f32.gmra.mrb[0].mxu0 %v488
    %v576 = vpop.f32.mrb[0].mxu0
    %v577 = vadd.f32 %v509, %v576
    %v578 = vpop.f32.mrb[0].mxu0
    %579 = vdwg.mxu0
    %580 = vst [vmem:[%s3] sm:$0xff] %v577
    // Predicated region
    $region18: #{net_forward.1} parent=1 // pred_check
      _
    $region19: #{net_forward.1} parent=1 // pred_check_branch
      %582 = sbr.rel (0) target = $region21
    $region20: #{net_forward.1} parent=1 // pred_region
      _
    $region21: #{net_forward.1} parent=1 // pred_fallthru
      _
    // Predicated region
    $region22: #{net_forward.1} parent=1 // pred_check
      _
    $region23: #{net_forward.1} parent=1 // pred_check_branch
      %584 = sbr.rel (0) target = $region25
    $region24: #{net_forward.1} parent=1 // pred_region
      _
    $region25: #{net_forward.1} parent=1 // pred_fallthru
      _
    %585 = vsyncpa [#allocation3], 1

</llo_original>
